<compile_context>
chip_gen: v6e
topology: v6e:2x2x1
jax: 0.10.0
libtpu: 0.0.40
codegen_flags: <defaults>
</compile_context>

<pallas_src>
import functools

import jax
import jax.numpy as jnp
from jax import lax
from jax.experimental import pallas as pl
from jax.experimental.pallas import tpu as pltpu


# ---------------------------------------------------------------------------
# Kernels
# ---------------------------------------------------------------------------
def _avwgcn_prep_kernel(cheb_k, n_real, use_bf16,
                        e_ref, wb_ref, gamma_ref, beta_ref,
                        sup_ref, wall_ref):
    """Node-level prep shared by all batches (runs once, grid-less).

    e_ref:     (Np, D)           node embeddings (rows >= n_real are zero padding)
    wb_ref:    (D, O*K*I + O)    weights_pool flattened (o,k,i)-major, bias_pool as last O cols
    gamma/beta:(1, D)            layernorm affine
    sup_ref:   (K-1, Np, Np)     Chebyshev supports T_1..T_{K-1} (T_0 = I handled implicitly later)
    wall_ref:  (Np, O*K*I + O)   per-node weights + bias slab (float32)
    """
    E = e_ref[...]
    n_pad = E.shape[0]

    # LayerNorm(node_embeddings), eps=1e-12 (dropout is identity in eval mode)
    mu = jnp.mean(E, axis=-1, keepdims=True)
    var = jnp.mean((E - mu) * (E - mu), axis=-1, keepdims=True)
    E_ln = (E - mu) * lax.rsqrt(var + 1e-12) * gamma_ref[...] + beta_ref[...]

    # S = softmax(elu(E_ln @ E_ln^T), axis=-1); padded columns masked out before softmax
    logits = lax.dot_general(E_ln, E_ln, (((1,), (1,)), ((), ())),
                             preferred_element_type=jnp.float32)
    # clamp before exp so the discarded branch of the where never produces inf
    elu = jnp.where(logits > 0, logits, jnp.exp(jnp.minimum(logits, 0.0)) - 1.0)
    if n_real < n_pad:
        col_pad = lax.broadcasted_iota(jnp.int32, (n_pad, n_pad), 1)
        elu = jnp.where(col_pad < n_real, elu, -1e9)
    m = jnp.max(elu, axis=-1, keepdims=True)
    p = jnp.exp(elu - m)
    # exact normalization: prep runs once per forward, approx reciprocal not worth the error
    S = p / jnp.sum(p, axis=-1, keepdims=True)

    sup_ref[0] = S.astype(sup_ref.dtype)
    if cheb_k >= 3:
        # T2 = 2*S@S - I without materializing eye: subtract 1 on the diagonal.
        row = lax.broadcasted_iota(jnp.int32, (n_pad, n_pad), 0)
        col = lax.broadcasted_iota(jnp.int32, (n_pad, n_pad), 1)
        diag = row == col
        t2 = 2.0 * jnp.dot(S, S, preferred_element_type=jnp.float32)
        t2 = jnp.where(diag, t2 - 1.0, t2)
        sup_ref[1] = t2.astype(sup_ref.dtype)
        t_km2, t_km1 = S, t2
        for k in range(3, cheb_k):
            t_k = 2.0 * jnp.dot(S, t_km1, preferred_element_type=jnp.float32) - t_km2
            sup_ref[k - 1] = t_k.astype(sup_ref.dtype)
            t_km2, t_km1 = t_km1, t_k

    # ONE lane-dense MXU push for all per-node weights + bias: (Np, D) @ (D, O*K*I + O)
    lhs = E_ln.astype(jnp.bfloat16) if use_bf16 else E_ln
    wall_ref[...] = jnp.dot(lhs, wb_ref[...], preferred_element_type=jnp.float32)


def _avwgcn_gconv_kernel(cheb_k, dim_in, dim_out, batch_block, has_xrow, *refs):
    """Per (batch-block, node-block) graph convolution.

    refs (has_xrow=True):  x_ref, xrow_ref, sup_ref, wall_ref, out_ref
    refs (has_xrow=False): x_ref,           sup_ref, wall_ref, out_ref   (node block == full N)

    x_ref:    (1, Np, I*BB)      x3[g, m, i*BB+bb] = x[g*BB+bb, m, i]   ((i, bb) lane order)
    xrow_ref: (1, TN, I*BB)      node-row block of the same array (identity-support term)
    sup_ref:  (K-1, TN, Np)      node-row block of the Chebyshev supports (bf16 by default)
    wall_ref: (TN, O*K*I + O)    per-node weights slab, (o,k,i)-major, bias as the last O columns
    out_ref:  (1, TN, O*BB)      out3[g, n, o*BB+bb] = out[g*BB+bb, n, o]   ((o, bb) lane order)
    """
    K, I, O, BB = cheb_k, dim_in, dim_out, batch_block
    if has_xrow:
        x_ref, xrow_ref, sup_ref, wall_ref, out_ref = refs
    else:
        x_ref, sup_ref, wall_ref, out_ref = refs
        xrow_ref = None
    KI = K * I
    TN = wall_ref.shape[0]

    x_all = x_ref[0]                                       # (Np, I*BB), bf16 by default
    # k = 0 is the identity support: supports[0] @ x == x, so use the x rows of this node block.
    x0 = (xrow_ref[0] if has_xrow else x_all).astype(jnp.float32)

    # k >= 1: one (TN, Np) @ (Np, I*BB) MXU matmul per support term (lane-dense RHS).
    xg = [x0]
    for k in range(1, K):
        xg.append(jnp.dot(sup_ref[k - 1], x_all, preferred_element_type=jnp.float32))
    # pre-slice the (TN, BB) batch-block tiles once (reused for every output channel)
    xg_cols = [[xg[k][:, i * BB:(i + 1) * BB] for i in range(I)] for k in range(K)]

    # out[n, o*BB + bb] = bias[n, o] + sum_{k,i} W[n, k, i, o] * xg[k][n, i*BB + bb]
    # Every FMA is (TN, BB) wide; the weight columns for a fixed o are a single contiguous
    # (TN, K*I) ref slice (no whole-slab materialization); 2-4 partial accumulators for ILP.
    n_acc = 4 if KI >= 8 else 2
    for o in range(O):
        w_o = wall_ref[:, o * KI:(o + 1) * KI]             # (TN, K*I)  one ref load
        b_o = wall_ref[:, O * KI + o:O * KI + o + 1]       # (TN, 1)    bias column
        accs = [jnp.zeros((TN, BB), jnp.float32) for _ in range(n_acc)]
        for k in range(K):
            for i in range(I):
                ki = k * I + i
                accs[ki % n_acc] = accs[ki % n_acc] + w_o[:, ki:ki + 1] * xg_cols[k][i]
        total = accs[0]
        for a in accs[1:]:
            total = total + a
        out_ref[0, :, o * BB:(o + 1) * BB] = total + b_o   # direct per-channel ref store


# ---------------------------------------------------------------------------
# Generation-aware helpers
# ---------------------------------------------------------------------------
def _round_up(a, m):
    return ((a + m - 1) // m) * m


def _vmem_capacity_bytes():
    """Physical per-core VMEM; conservative 64 MiB fallback (v7x) if the query fails."""
    try:
        cap = getattr(pltpu.get_tpu_info(), "vmem_capacity_bytes", None)
        if cap:
            return int(cap)
    except Exception:
        pass
    return 64 * 1024 * 1024


def _vmem_limit(est_bytes, cap_bytes):
    """Scoped-VMEM request with headroom; None if it fits even v5e's 16 MiB default."""
    need = int(est_bytes) + (2 << 20)
    if need <= 16 * 1024 * 1024:
        return None
    return min(need, int(cap_bytes * 0.85))


def _pick_node_block(n_pad, cap_bytes):
    """Largest multiple-of-8 divisor of padded N not exceeding a generation-aware target."""
    target = 512 if cap_bytes >= 96 * 1024 * 1024 else 256
    if n_pad <= target:
        return n_pad
    best = 8
    for t in range(8, target + 1, 8):
        if n_pad % t == 0:
            best = t
    return best


def _pick_batch_block(batch, dim_in, dim_out, node_grid, cap_bytes):
    """Maximize BB (wide FMAs / lane-dense output, prefer BB*dim_out >= 128); only keep the
    '>=2 grid blocks' megacore rule when the node axis does not already split the grid."""
    rhs_lane_cap = 1024 if cap_bytes >= 96 * 1024 * 1024 else 512
    divisors = [d for d in range(1, batch + 1) if batch % d == 0]
    feasible = [d for d in divisors if d * dim_in <= rhs_lane_cap] or [1]
    dense = [d for d in feasible if d * dim_out >= 128]
    bb = max(feasible)
    if node_grid == 1 and batch // bb < 2:
        cand = [d for d in feasible if batch // d >= 2]
        if cand:
            c = max(cand)
            if (c * dim_out >= 128) or not dense:
                bb = c
    return bb


# ---------------------------------------------------------------------------
# Wrapper
# ---------------------------------------------------------------------------
def avwgcn_forward(x, node_embeddings, weights_pool, bias_pool, ln_gamma, ln_beta,
                   cheb_k, *, batch_block=None, node_block=None,
                   use_bf16_matmul=True, sup_major=None):
    """AVWGCN forward (mask=None path, eval mode). Returns (B, N, dim_out) float32."""
    B, N, I = x.shape
    D = node_embeddings.shape[1]
    K = cheb_k
    O = weights_pool.shape[-1]
    assert K >= 2, "cheb_k must be >= 2"
    assert weights_pool.shape == (D, K, I, O)

    cap = _vmem_capacity_bytes()
    compute_dtype = jnp.bfloat16 if use_bf16_matmul else jnp.float32
    cbytes = 2 if use_bf16_matmul else 4

    # Pad N up to a multiple of 8 so node tiling / (8,128) blocks are always legal.
    N_pad = max(8, _round_up(N, 8))
    pad_n = N_pad - N
    KI = K * I
    slab = O * KI + O

    # weights_pool flattened (o,k,i)-major, bias_pool fused as the last O columns (bf16 at source).
    wb2d = jnp.concatenate(
        [jnp.transpose(weights_pool, (0, 3, 1, 2)).reshape(D, O * KI),
         bias_pool], axis=1).astype(compute_dtype)
    gamma2d = ln_gamma.reshape(1, D).astype(jnp.float32)
    beta2d = ln_beta.reshape(1, D).astype(jnp.float32)
    e_pad = jnp.pad(node_embeddings.astype(jnp.float32), ((0, pad_n), (0, 0)))

    # ---- call 1: shared node-level prep (LayerNorm, supports in bf16, fused weight slab) ----
    prep_est = (4 * (3 * N_pad * D + N_pad * slab) + cbytes * D * slab
                + cbytes * (K - 1) * N_pad * N_pad + 6 * 4 * N_pad * N_pad)
    vmem = pl.BlockSpec(memory_space=pltpu.MemorySpace.VMEM)
    sup, wall = pl.pallas_call(
        functools.partial(_avwgcn_prep_kernel, K, N, use_bf16_matmul),
        out_shape=(jax.ShapeDtypeStruct((K - 1, N_pad, N_pad), compute_dtype),
                   jax.ShapeDtypeStruct((N_pad, slab), jnp.float32)),
        in_specs=[vmem, vmem, vmem, vmem],
        out_specs=(pl.BlockSpec(memory_space=pltpu.MemorySpace.VMEM),
                   pl.BlockSpec(memory_space=pltpu.MemorySpace.VMEM)),
        compiler_params=pltpu.CompilerParams(vmem_limit_bytes=_vmem_limit(prep_est, cap)),
    )(e_pad, wb2d, gamma2d, beta2d)

    # ---- tiling ----
    TN = _pick_node_block(N_pad, cap) if node_block is None else node_block
    assert N_pad % TN == 0 and (TN == N_pad or TN % 8 == 0), \
        "node_block must divide padded N and be a multiple of 8 (or the full padded N)"
    NG = N_pad // TN
    BB = _pick_batch_block(B, I, O, NG, cap) if batch_block is None else batch_block
    assert B % BB == 0, "batch_block must divide batch"
    G = B // BB
    has_xrow = NG > 1

    # x3[g, m, i*BB + bb] = x[g*BB + bb, m, i]    ((i, bb) lane order, bf16 at source)
    x_pad = jnp.pad(x.astype(jnp.float32), ((0, 0), (0, pad_n), (0, 0)))
    x3 = (x_pad.reshape(G, BB, N_pad, I).transpose(0, 2, 3, 1)
          .reshape(G, N_pad, I * BB).astype(compute_dtype))

    # Adaptive grid order: make the bigger per-step operand invariant across the inner axis.
    sup_major_flag = ((K - 1) * TN >= BB * I) if sup_major is None else bool(sup_major)
    if sup_major_flag:
        grid = (NG, G)
        x_map = lambda n, g: (g, 0, 0)
        xrow_map = lambda n, g: (g, n, 0)
        sup_map = lambda n, g: (0, n, 0)
        wall_map = lambda n, g: (n, 0)
        out_map = lambda n, g: (g, n, 0)
    else:
        grid = (G, NG)
        x_map = lambda g, n: (g, 0, 0)
        xrow_map = lambda g, n: (g, n, 0)
        sup_map = lambda g, n: (0, n, 0)
        wall_map = lambda g, n: (n, 0)
        out_map = lambda g, n: (g, n, 0)

    in_specs = [pl.BlockSpec((1, N_pad, I * BB), x_map)]
    operands = [x3]
    if has_xrow:
        in_specs.append(pl.BlockSpec((1, TN, I * BB), xrow_map))
        operands.append(x3)                      # same array, node-row block view
    in_specs += [pl.BlockSpec((K - 1, TN, N_pad), sup_map),
                 pl.BlockSpec((TN, slab), wall_map)]
    operands += [sup, wall]

    steps = G * NG
    gconv_est = (2 * N_pad * BB * I * cbytes
                 + (2 * TN * BB * I * cbytes if has_xrow else 0)
                 + 2 * (K - 1) * TN * N_pad * cbytes
                 + 2 * TN * slab * 4 + 2 * TN * O * BB * 4
                 + K * TN * BB * I * 4 + TN * (KI + 8 * BB) * 4)
    if sup_major_flag:
        sup_stream = (K - 1) * N_pad * N_pad * cbytes + N_pad * slab * 4
        x_stream = steps * N_pad * BB * I * cbytes
    else:
        sup_stream = G * ((K - 1) * N_pad * N_pad * cbytes + N_pad * slab * 4)
        x_stream = G * N_pad * BB * I * cbytes
    if has_xrow:
        x_stream += steps * TN * BB * I * cbytes
    cost = pl.CostEstimate(
        flops=int(steps * (2 * (K - 1) * TN * N_pad * BB * I + 2 * TN * KI * O * BB)),
        transcendentals=0,
        bytes_accessed=int(sup_stream + x_stream + B * N_pad * O * 4))

    out3 = pl.pallas_call(
        functools.partial(_avwgcn_gconv_kernel, K, I, O, BB, has_xrow),
        out_shape=jax.ShapeDtypeStruct((G, N_pad, O * BB), jnp.float32),
        grid=grid,
        in_specs=in_specs,
        out_specs=pl.BlockSpec((1, TN, O * BB), out_map),
        compiler_params=pltpu.CompilerParams(
            dimension_semantics=("parallel", "parallel"),
            vmem_limit_bytes=_vmem_limit(gconv_est, cap)),
        cost_estimate=cost,
    )(*operands)

    # (G, N_pad, O*BB) -> (B, N, O)   (layout plumbing only; padded rows dropped)
    return (out3[:, :N, :].reshape(G, N, O, BB)
            .transpose(0, 3, 1, 2).reshape(B, N, O))


# ---------------------------------------------------------------------------
# Pure-JAX reference (mirrors the PyTorch forward, mask=None)
# ---------------------------------------------------------------------------
def avwgcn_reference(x, E, weights_pool, bias_pool, gamma, beta, cheb_k):
    N = E.shape[0]
    mu = E.mean(-1, keepdims=True)
    var = ((E - mu) ** 2).mean(-1, keepdims=True)
    E_ln = (E - mu) / jnp.sqrt(var + 1e-12) * gamma + beta
    logits = E_ln @ E_ln.T
    elu = jnp.where(logits > 0, logits, jnp.exp(jnp.minimum(logits, 0.0)) - 1.0)
    S = jax.nn.softmax(elu, axis=-1)
    supports = [jnp.eye(N, dtype=jnp.float32), S]
    for _ in range(2, cheb_k):
        supports.append(2.0 * S @ supports[-1] - supports[-2])
    sup = jnp.stack(supports, axis=0)
    W = jnp.einsum('nd,dkio->nkio', E_ln, weights_pool)
    bias = E_ln @ bias_pool
    x_g = jnp.einsum('knm,bmc->bknc', sup, x).transpose(0, 2, 1, 3)
    return jnp.einsum('bnki,nkio->bno', x_g, W) + bias


if __name__ == "__main__":
    # Small, TPU-friendly shapes consistent with the module.
    B, N, I, O, D, K = 4, 16, 4, 8, 32, 3   # batch, num_node, dim_in, dim_out, embed_dim, cheb_k

    key = jax.random.PRNGKey(0)
    k_x, k_e, k_wp, k_bp = jax.random.split(key, 4)
    x = jax.random.normal(k_x, (B, N, I), dtype=jnp.float32)
    node_embeddings = jax.random.normal(k_e, (N, D), dtype=jnp.float32)
    weights_pool = 0.1 * jax.random.normal(k_wp, (D, K, I, O), dtype=jnp.float32)
    bias_pool = 0.1 * jax.random.normal(k_bp, (D, O), dtype=jnp.float32)
    ln_gamma = jnp.ones((D,), dtype=jnp.float32)   # nn.LayerNorm default init
    ln_beta = jnp.zeros((D,), dtype=jnp.float32)

    ref = avwgcn_reference(x, node_embeddings, weights_pool, bias_pool, ln_gamma, ln_beta, K)

    # 1) default path: bf16 matmuls/supports, auto tiling, adaptive (sup-major) grid order.
    out = avwgcn_forward(x, node_embeddings, weights_pool, bias_pool, ln_gamma, ln_beta, K)
    out = jax.block_until_ready(out)
    assert out.shape == (B, N, O)
    assert jnp.allclose(out, ref, atol=4e-2, rtol=4e-2), \
        f"bf16 path: max abs err {jnp.max(jnp.abs(out - ref))}"

    # 2) float32 path, explicit node-row + per-batch tiling, batch-major grid order.
    out2 = avwgcn_forward(x, node_embeddings, weights_pool, bias_pool, ln_gamma, ln_beta, K,
                          batch_block=1, node_block=8, use_bf16_matmul=False, sup_major=False)
    out2 = jax.block_until_ready(out2)
    assert jnp.allclose(out2, ref, atol=2e-3, rtol=2e-3), \
        f"f32 path: max abs err {jnp.max(jnp.abs(out2 - ref))}"

    # 3) non-multiple-of-8 node count (exercises node padding + score masking), cheb_k=2 path.
    N2, K2 = 13, 2
    k_x2, k_e2, k_wp2, k_bp2 = jax.random.split(jax.random.PRNGKey(1), 4)
    x2 = jax.random.normal(k_x2, (B, N2, I), dtype=jnp.float32)
    e2 = jax.random.normal(k_e2, (N2, D), dtype=jnp.float32)
    wp2 = 0.1 * jax.random.normal(k_wp2, (D, K2, I, O), dtype=jnp.float32)
    bp2 = 0.1 * jax.random.normal(k_bp2, (D, O), dtype=jnp.float32)
    ref3 = avwgcn_reference(x2, e2, wp2, bp2, ln_gamma, ln_beta, K2)
    out3 = avwgcn_forward(x2, e2, wp2, bp2, ln_gamma, ln_beta, K2)
    out3 = jax.block_until_ready(out3)
    assert out3.shape == (B, N2, O)
    assert jnp.allclose(out3, ref3, atol=4e-2, rtol=4e-2), \
        f"padded path: max abs err {jnp.max(jnp.abs(out3 - ref3))}"

    print("KERNEL_OK")
</pallas_src>

<mosaic_0001>
module attributes {stable_mosaic.version = 11 : i64} {
  func.func @_avwgcn_prep_kernel(%arg0: memref<16x32xf32, #tpu.memory_space<vmem>>, %arg1: memref<32x104xbf16, #tpu.memory_space<vmem>>, %arg2: memref<1x32xf32, #tpu.memory_space<vmem>>, %arg3: memref<1x32xf32, #tpu.memory_space<vmem>>, %arg4: memref<2x16x16xbf16, #tpu.memory_space<vmem>>, %arg5: memref<16x104xf32, #tpu.memory_space<vmem>>) attributes {dimension_semantics = [], scalar_prefetch = 0 : i64, scratch_operands = 0 : i64, tpu.core_type = #tpu.core_type<tc>} {
    %c0 = arith.constant 0 : index
    %c0_0 = arith.constant 0 : index
    %0 = vector.load %arg0[%c0, %c0_0] : memref<16x32xf32, #tpu.memory_space<vmem>>, vector<16x32xf32>
    %cst = arith.constant dense<0.000000e+00> : vector<16xf32>
    %1 = vector.multi_reduction <add>, %0, %cst [1] : vector<16x32xf32> to vector<16xf32>
    %2 = vector.shape_cast %1 : vector<16xf32> to vector<16x1xf32>
    %cst_1 = arith.constant 3.200000e+01 : f32
    %3 = vector.broadcast %cst_1 : f32 to vector<16x1xf32>
    %4 = arith.divf %2, %3 : vector<16x1xf32>
    %5 = vector.broadcast %4 : vector<16x1xf32> to vector<16x32xf32>
    %6 = arith.subf %0, %5 : vector<16x32xf32>
    %7 = vector.broadcast %4 : vector<16x1xf32> to vector<16x32xf32>
    %8 = arith.subf %0, %7 : vector<16x32xf32>
    %9 = arith.mulf %6, %8 : vector<16x32xf32>
    %cst_2 = arith.constant dense<0.000000e+00> : vector<16xf32>
    %10 = vector.multi_reduction <add>, %9, %cst_2 [1] : vector<16x32xf32> to vector<16xf32>
    %11 = vector.shape_cast %10 : vector<16xf32> to vector<16x1xf32>
    %cst_3 = arith.constant 3.200000e+01 : f32
    %12 = vector.broadcast %cst_3 : f32 to vector<16x1xf32>
    %13 = arith.divf %11, %12 : vector<16x1xf32>
    %14 = vector.broadcast %4 : vector<16x1xf32> to vector<16x32xf32>
    %15 = arith.subf %0, %14 : vector<16x32xf32>
    %cst_4 = arith.constant 9.99999996E-13 : f32
    %16 = vector.broadcast %cst_4 : f32 to vector<16x1xf32>
    %17 = arith.addf %13, %16 : vector<16x1xf32>
    %18 = math.rsqrt %17 : vector<16x1xf32>
    %19 = vector.broadcast %18 : vector<16x1xf32> to vector<16x32xf32>
    %20 = arith.mulf %15, %19 : vector<16x32xf32>
    %c0_5 = arith.constant 0 : index
    %c0_6 = arith.constant 0 : index
    %21 = vector.load %arg2[%c0_5, %c0_6] : memref<1x32xf32, #tpu.memory_space<vmem>>, vector<1x32xf32>
    %22 = vector.broadcast %21 : vector<1x32xf32> to vector<16x32xf32>
    %23 = arith.mulf %20, %22 : vector<16x32xf32>
    %c0_7 = arith.constant 0 : index
    %c0_8 = arith.constant 0 : index
    %24 = vector.load %arg3[%c0_7, %c0_8] : memref<1x32xf32, #tpu.memory_space<vmem>>, vector<1x32xf32>
    %25 = vector.broadcast %24 : vector<1x32xf32> to vector<16x32xf32>
    %26 = arith.addf %23, %25 : vector<16x32xf32>
    %cst_9 = arith.constant dense<0.000000e+00> : vector<16x16xf32>
    %27 = tpu.matmul %26, %26, %cst_9 {dimension_numbers = #tpu.dot_dimension_numbers<[1], [1], [0], [0], [0, 0, 1, 0], [], []>} : vector<16x32xf32>, vector<16x32xf32>, vector<16x16xf32> -> vector<16x16xf32>
    %cst_10 = arith.constant 0.000000e+00 : f32
    %28 = vector.broadcast %cst_10 : f32 to vector<16x16xf32>
    %29 = arith.cmpf ogt, %27, %28 : vector<16x16xf32>
    %cst_11 = arith.constant 0.000000e+00 : f32
    %30 = vector.broadcast %cst_11 : f32 to vector<16x16xf32>
    %31 = arith.minimumf %27, %30 : vector<16x16xf32>
    %32 = math.exp %31 : vector<16x16xf32>
    %cst_12 = arith.constant 1.000000e+00 : f32
    %33 = vector.broadcast %cst_12 : f32 to vector<16x16xf32>
    %34 = arith.subf %32, %33 : vector<16x16xf32>
    %35 = arith.select %29, %27, %34 : vector<16x16xi1>, vector<16x16xf32>
    %cst_13 = arith.constant dense<0xFF800000> : vector<16xf32>
    %36 = vector.multi_reduction <maximumf>, %35, %cst_13 [1] : vector<16x16xf32> to vector<16xf32>
    %37 = vector.shape_cast %36 : vector<16xf32> to vector<16x1xf32>
    %38 = vector.broadcast %37 : vector<16x1xf32> to vector<16x16xf32>
    %39 = arith.subf %35, %38 : vector<16x16xf32>
    %40 = math.exp %39 : vector<16x16xf32>
    %cst_14 = arith.constant dense<0.000000e+00> : vector<16xf32>
    %41 = vector.multi_reduction <add>, %40, %cst_14 [1] : vector<16x16xf32> to vector<16xf32>
    %42 = vector.shape_cast %41 : vector<16xf32> to vector<16x1xf32>
    %43 = vector.broadcast %42 : vector<16x1xf32> to vector<16x16xf32>
    %44 = arith.divf %40, %43 : vector<16x16xf32>
    %45 = arith.truncf %44 : vector<16x16xf32> to vector<16x16xbf16>
    %c0_15 = arith.constant 0 : index
    %c0_16 = arith.constant 0 : index
    %c0_17 = arith.constant 0 : index
    %46 = vector.load %arg4[%c0_15, %c0_16, %c0_17] : memref<2x16x16xbf16, #tpu.memory_space<vmem>>, vector<1x16x16xbf16>
    %47 = vector.shape_cast %46 : vector<1x16x16xbf16> to vector<16x16xbf16>
    %48 = vector.shape_cast %45 : vector<16x16xbf16> to vector<1x16x16xbf16>
    tpu.vector_store %arg4[%c0_15, %c0_16, %c0_17], %48 {strides = array<i32>} : memref<2x16x16xbf16, #tpu.memory_space<vmem>>, vector<1x16x16xbf16>,
    %49 = tpu.iota {dimensions = array<i32: 0>} : vector<16x16xi32>
    %50 = tpu.iota {dimensions = array<i32: 1>} : vector<16x16xi32>
    %51 = arith.cmpi eq, %49, %50 : vector<16x16xi32>
    %cst_18 = arith.constant dense<0.000000e+00> : vector<16x16xf32>
    %52 = tpu.matmul %44, %44, %cst_18 {dimension_numbers = #tpu.dot_dimension_numbers<[1], [0], [0], [1], [0, 0, 1, 1], [], []>} : vector<16x16xf32>, vector<16x16xf32>, vector<16x16xf32> -> vector<16x16xf32>
    %cst_19 = arith.constant 2.000000e+00 : f32
    %53 = vector.broadcast %cst_19 : f32 to vector<16x16xf32>
    %54 = arith.mulf %53, %52 : vector<16x16xf32>
    %cst_20 = arith.constant 1.000000e+00 : f32
    %55 = vector.broadcast %cst_20 : f32 to vector<16x16xf32>
    %56 = arith.subf %54, %55 : vector<16x16xf32>
    %57 = arith.select %51, %56, %54 : vector<16x16xi1>, vector<16x16xf32>
    %58 = arith.truncf %57 : vector<16x16xf32> to vector<16x16xbf16>
    %c1 = arith.constant 1 : index
    %c0_21 = arith.constant 0 : index
    %c0_22 = arith.constant 0 : index
    %59 = vector.load %arg4[%c1, %c0_21, %c0_22] : memref<2x16x16xbf16, #tpu.memory_space<vmem>>, vector<1x16x16xbf16>
    %60 = vector.shape_cast %59 : vector<1x16x16xbf16> to vector<16x16xbf16>
    %61 = vector.shape_cast %58 : vector<16x16xbf16> to vector<1x16x16xbf16>
    tpu.vector_store %arg4[%c1, %c0_21, %c0_22], %61 {strides = array<i32>} : memref<2x16x16xbf16, #tpu.memory_space<vmem>>, vector<1x16x16xbf16>,
    %62 = arith.truncf %26 : vector<16x32xf32> to vector<16x32xbf16>
    %c0_23 = arith.constant 0 : index
    %c0_24 = arith.constant 0 : index
    %63 = vector.load %arg1[%c0_23, %c0_24] : memref<32x104xbf16, #tpu.memory_space<vmem>>, vector<32x104xbf16>
    %cst_25 = arith.constant dense<0.000000e+00> : vector<16x104xf32>
    %64 = tpu.matmul %62, %63, %cst_25 {dimension_numbers = #tpu.dot_dimension_numbers<[1], [0], [0], [1], [0, 0, 1, 1], [], []>} : vector<16x32xbf16>, vector<32x104xbf16>, vector<16x104xf32> -> vector<16x104xf32>
    %c0_26 = arith.constant 0 : index
    %c0_27 = arith.constant 0 : index
    %65 = vector.load %arg5[%c0_26, %c0_27] : memref<16x104xf32, #tpu.memory_space<vmem>>, vector<16x104xf32>
    tpu.vector_store %arg5[%c0_26, %c0_27], %64 {strides = array<i32>} : memref<16x104xf32, #tpu.memory_space<vmem>>, vector<16x104xf32>,
    return
  }
}

</mosaic_0001>

<llo_original>
// kernel: tpu_custom_call.1
$region0: #{tpu_custom_call.1}
  #allocation0 [shape = 'u32[]', space=smem, size = 0x4, offset = 0x4, fixed_abs, tag = 'smem constant byte address 0x4 - core index']
  #allocation1 [shape = 'u32[144,128]{1,0:T(1,128)}', space=vmem, size = 0x12000, scoped, tag = 'internal scratch']
  %s0 = inlined_call_operand.hbm [shape: f32[16,32], index: 0, kind: input, shape index: {}]
  %s1 = inlined_call_operand.hbm [shape: bf16[32,104], index: 1, kind: input, shape index: {}]
  %s2 = inlined_call_operand.vmem [shape: f32[1,32], index: 2, kind: input, shape index: {}]
  %s3 = inlined_call_operand.vmem [shape: f32[1,32], index: 3, kind: input, shape index: {}]
  %s4 = inlined_call_operand.hbm [shape: bf16[2,16,16], index: 4, kind: output, shape index: {0}]
  %s5 = inlined_call_operand.hbm [shape: f32[16,104], index: 5, kind: output, shape index: {1}]
  %6 = xla_tuple %s4, %s5
  %s7 = sld [smem:[#allocation0]]
  $region42: #{tpu_custom_call.1} parent=0
    _
  %s9 = ssub.s32 1, %s7
  %s10 = scalar_select 0, %s9, %s7
  $region1: #{tpu_custom_call.1} parent=0
    #allocation2 [shape = 'u8[8192]{0}', space=vmem, size = 0x2000, scoped, tag = 'input window, operand 0, single buffered']
    #allocation3 [shape = 's32[1]{0}', space=sflag, size = 0x4, scoped, tag = 'scoped memory for tpu_custom_call.1']
    #allocation4 [shape = 's32[1]{0}', space=sflag, size = 0x4, scoped, tag = 'scoped memory for tpu_custom_call.1']
    #allocation5 [shape = 'u8[8192]{0}', space=vmem, size = 0x2000, scoped, tag = 'input window, operand 1, single buffered']
    #allocation6 [shape = 's32[1]{0}', space=sflag, size = 0x4, scoped, tag = 'scoped memory for tpu_custom_call.1']
    #allocation7 [shape = 'u8[8192]{0}', space=vmem, size = 0x2000, scoped, tag = 'output window, operand 0, single buffered']
    #allocation8 [shape = 'u8[8192]{0}', space=vmem, size = 0x2000, scoped, tag = 'output window, operand 1, single buffered']
    #allocation9 [shape = 's32[1]{0}', space=sflag, size = 0x4, scoped, tag = 'scoped memory for tpu_custom_call.1']
    %11 = vsyncpa [#allocation3], 0
    %12 = vsyncpa [#allocation6], 0
    %13 = vsyncpa [#allocation4], 0
    %14 = vsyncpa [#allocation9], 0
    // Predicated region
    $region2: #{tpu_custom_call.1} parent=1 // pred_check
      _
    $region3: #{tpu_custom_call.1} parent=1 // pred_check_branch
      %16 = sbr.rel (0) target = $region5
    $region4: #{tpu_custom_call.1} parent=1 // pred_region
      %s18 = ssub.s32 256, 256
      %19 = vsyncadd [#allocation3], %s18
      %s20 = sshll.u32 [#allocation2], 4
      %s21 = int_to_ptr.vmem [resolvable:$true] %s20
      %26 = dma.hbm_to_vmem [thread:$0]  %s0, 256, %s21, [#allocation3], 128, 128, 8
    $region5: #{tpu_custom_call.1} parent=1 // pred_fallthru
      _
    // Predicated region
    $region6: #{tpu_custom_call.1} parent=1 // pred_check
      _
    $region7: #{tpu_custom_call.1} parent=1 // pred_check_branch
      %28 = sbr.rel (0) target = $region9
    $region8: #{tpu_custom_call.1} parent=1 // pred_region
      %s30 = ssub.s32 256, 256
      %31 = vsyncadd [#allocation6], %s30
      %s32 = sshll.u32 [#allocation5], 4
      %s33 = int_to_ptr.vmem [resolvable:$true] %s32
      %38 = dma.hbm_to_vmem [thread:$0]  %s1, 256, %s33, [#allocation6], 64, 64, 4
    $region9: #{tpu_custom_call.1} parent=1 // pred_fallthru
      _
    // Predicated region
    $region10: #{tpu_custom_call.1} parent=1 // pred_check
      _
    $region11: #{tpu_custom_call.1} parent=1 // pred_check_branch
      %40 = sbr.rel (0) target = $region13
    $region12: #{tpu_custom_call.1} parent=1 // pred_region
      _
    $region13: #{tpu_custom_call.1} parent=1 // pred_fallthru
      _
    // Predicated region
    $region14: #{tpu_custom_call.1} parent=1 // pred_check
      _
    $region15: #{tpu_custom_call.1} parent=1 // pred_check_branch
      %42 = sbr.rel (0) target = $region17
    $region16: #{tpu_custom_call.1} parent=1 // pred_region
      _
    $region17: #{tpu_custom_call.1} parent=1 // pred_fallthru
      _
    // Predicated region
    $region18: #{tpu_custom_call.1} parent=1 // pred_check
      _
    $region19: #{tpu_custom_call.1} parent=1 // pred_check_branch
      %44 = sbr.rel (0) target = $region21
    $region20: #{tpu_custom_call.1} parent=1 // pred_region
      %45 = dma.done [#allocation3], 256
    $region21: #{tpu_custom_call.1} parent=1 // pred_fallthru
      _
    // Predicated region
    $region22: #{tpu_custom_call.1} parent=1 // pred_check
      _
    $region23: #{tpu_custom_call.1} parent=1 // pred_check_branch
      %47 = sbr.rel (0) target = $region25
    $region24: #{tpu_custom_call.1} parent=1 // pred_region
      %48 = dma.done [#allocation6], 256
    $region25: #{tpu_custom_call.1} parent=1 // pred_fallthru
      _
    %v50 = vld [vmem:[#allocation2] sm:$0xff]
    %v51 = vld [vmem:[#allocation2 + $0x8] sm:$0xff]
    %vm52 = vcmask 261120
    %v53 = vsel %vm52, %v50, 0.0
    %54 = vadd.xlane.f32.xlu0 %v53
    %v55 = vpop.xlane.xlu0 %54
    %v56 = vsel %vm52, %v51, 0.0
    %57 = vadd.xlane.f32.xlu0 %v56
    %v58 = vpop.xlane.xlu0 %57
    %v59 = vrcp.pop 32.0
    %v60 = vmul.f32 %v55, %v59
    %v61 = vmul.f32 %v58, %v59
    %v62 = vsub.f32 %v50, %v60
    %v63 = vsub.f32 %v51, %v61
    %v64 = vmul.f32 %v62, %v62
    %v65 = vmul.f32 %v63, %v63
    %v66 = vsel %vm52, %v64, 0.0
    %67 = vadd.xlane.f32.xlu0 %v66
    %v68 = vpop.xlane.xlu0 %67
    %v69 = vsel %vm52, %v65, 0.0
    %70 = vadd.xlane.f32.xlu0 %v69
    %v71 = vpop.xlane.xlu0 %70
    %v72 = vmul.f32 %v68, %v59
    %v73 = vmul.f32 %v71, %v59
    %v74 = vadd.f32 %v72, 1e-12
    %v75 = vadd.f32 %v73, 1e-12
    %v76 = vrsqrt.pop %v74
    %v77 = vrsqrt.pop %v75
    %v78 = vmul.f32 %v62, %v76
    %v79 = vmul.f32 %v63, %v77
    %v80 = vld [vmem:[%s2] sm:$0x1]
    %v82 = vlaneseq
    %v83 = vshrl.u32 %v82, 7
    %v84 = vsub.s32 0, %v83
    %v85 = vrot.slane %v80, %v84
    %v87 = vmul.f32 %v78, %v85
    %v88 = vmul.f32 %v79, %v85
    %v89 = vld [vmem:[%s3] sm:$0x1]
    %v91 = vlaneseq
    %v92 = vshrl.u32 %v91, 7
    %v93 = vsub.s32 0, %v92
    %v94 = vrot.slane %v89, %v93
    %v96 = vadd.f32 %v87, %v94
    %v97 = vadd.f32 %v88, %v94
    %v99 = vsel %vm52, %v96, 0
    %v102 = vsel %vm52, %v97, 0
    %104 = vmatprep.subr.mxu0 0.0
    %105 = vmatpush1.xpose.msra.mxu0 0.0
    %106 = vmatprep.subr.mxu0 0.0
    %107 = vmatpush1.xpose.msra.mxu0 0.0
    %108 = vmatprep.subr.mxu0 0.0
    %109 = vmatpush1.xpose.msra.mxu0 0.0
    %110 = vmatprep.subr.mxu0 0.0
    %111 = vmatpush1.xpose.msra.mxu0 0.0
    %112 = vmatprep.subr.mxu0 0.0
    %113 = vmatpush1.xpose.msra.mxu0 0.0
    %114 = vmatprep.subr.mxu0 0.0
    %115 = vmatpush1.xpose.msra.mxu0 0.0
    %116 = vmatprep.subr.mxu0 0.0
    %117 = vmatpush1.xpose.msra.mxu0 0.0
    %118 = vmatprep.subr.mxu0 0.0
    %119 = vmatpush1.xpose.msra.mxu0 0.0
    %120 = vmatprep.subr.mxu0 0.0
    %121 = vmatpush1.xpose.msra.mxu0 0.0
    %122 = vmatprep.subr.mxu0 0.0
    %123 = vmatpush1.xpose.msra.mxu0 0.0
    %124 = vmatprep.subr.mxu0 0.0
    %125 = vmatpush1.xpose.msra.mxu0 0.0
    %126 = vmatprep.subr.mxu0 0.0
    %127 = vmatpush1.xpose.msra.mxu0 0.0
    %128 = vmatprep.subr.mxu0 0.0
    %129 = vmatpush1.xpose.msra.mxu0 0.0
    %130 = vmatprep.subr.mxu0 0.0
    %131 = vmatpush1.xpose.msra.mxu0 0.0
    %132 = vmatprep.subr.mxu0 0.0
    %133 = vmatpush1.xpose.msra.mxu0 %v102
    %134 = vmatprep.subr.mxu0 0.0
    %135 = vmatpush1.xpose.msra.mxu0 %v99
    %136 = vmatprep.subr.mxu0 0.0
    %137 = vmatpush2.xpose.msra.mxu0 0.0
    %138 = vmatprep.subr.mxu0 0.0
    %139 = vmatpush2.xpose.msra.mxu0 0.0
    %140 = vmatprep.subr.mxu0 0.0
    %141 = vmatpush2.xpose.msra.mxu0 0.0
    %142 = vmatprep.subr.mxu0 0.0
    %143 = vmatpush2.xpose.msra.mxu0 0.0
    %144 = vmatprep.subr.mxu0 0.0
    %145 = vmatpush2.xpose.msra.mxu0 0.0
    %146 = vmatprep.subr.mxu0 0.0
    %147 = vmatpush2.xpose.msra.mxu0 0.0
    %148 = vmatprep.subr.mxu0 0.0
    %149 = vmatpush2.xpose.msra.mxu0 0.0
    %150 = vmatprep.subr.mxu0 0.0
    %151 = vmatpush2.xpose.msra.mxu0 0.0
    %152 = vmatprep.subr.mxu0 0.0
    %153 = vmatpush2.xpose.msra.mxu0 0.0
    %154 = vmatprep.subr.mxu0 0.0
    %155 = vmatpush2.xpose.msra.mxu0 0.0
    %156 = vmatprep.subr.mxu0 0.0
    %157 = vmatpush2.xpose.msra.mxu0 0.0
    %158 = vmatprep.subr.mxu0 0.0
    %159 = vmatpush2.xpose.msra.mxu0 0.0
    %160 = vmatprep.subr.mxu0 0.0
    %161 = vmatpush2.xpose.msra.mxu0 0.0
    %162 = vmatprep.subr.mxu0 0.0
    %163 = vmatpush2.xpose.msra.mxu0 0.0
    %164 = vmatprep.subr.mxu0 0.0
    %165 = vmatpush2.xpose.msra.mxu0 0.0
    %166 = vmatprep.subr.mxu0 0.0
    %167 = vmatpush2.xpose.msra.mxu0 0.0
    %168 = vmatprep.mubr.f32.mxu0 0.0
    %169 = vmatmul.mubr.f32.gmra.mxu0 %v99
    %v170 = vpop.f32.mrf.mxu0
    %v171 = vadd.f32 0.0, %v170
    %v172 = vpop.f32.mrf.mxu0
    %173 = vmatprep.mubr.f32.mxu0 0.0
    %174 = vmatmul.mubr.f32.gmra.mxu0 %v102
    %v175 = vpop.f32.mrf.mxu0
    %v176 = vadd.f32 0.0, %v175
    %v177 = vpop.f32.mrf.mxu0
    %178 = vdwg.mxu0
    %vm179 = vcmp.gt.f32.partialorder %v171, 0.0
    %vm180 = vcmp.gt.f32.partialorder %v176, 0.0
    %v181 = vmin.f32 %v171, 0.0
    %v182 = vmin.f32 %v176, 0.0
    %v183 = vmul.f32 %v181, 1.442695
    %v184 = vpow.pop %v183
    %v185 = vmul.f32 %v182, 1.442695
    %v186 = vpow.pop %v185
    %v187 = vsub.f32 %v184, 1.0
    %v188 = vsub.f32 %v186, 1.0
    %v189 = vsel %vm179, %v171, %v187
    %v190 = vsel %vm180, %v176, %v188
    %vm191 = vcmask 130048
    %v192 = vsel %vm191, %v189, -inf
    %193 = vmax.xlane.f32.xlu0 %v192
    %v194 = vpop.xlane.xlu0 %193
    %v195 = vsel %vm191, %v190, -inf
    %196 = vmax.xlane.f32.xlu0 %v195
    %v197 = vpop.xlane.xlu0 %196
    %v198 = vsub.f32 %v189, %v194
    %v199 = vsub.f32 %v190, %v197
    %v200 = vmul.f32 %v198, 1.442695
    %v201 = vpow.pop %v200
    %v202 = vmul.f32 %v199, 1.442695
    %v203 = vpow.pop %v202
    %v204 = vsel %vm191, %v201, 0.0
    %205 = vadd.xlane.f32.xlu0 %v204
    %v206 = vpop.xlane.xlu0 %205
    %v207 = vsel %vm191, %v203, 0.0
    %208 = vadd.xlane.f32.xlu0 %v207
    %v209 = vpop.xlane.xlu0 %208
    %v210 = vrcp.pop %v206
    %v211 = vmul.f32 %v201, %v210
    %v212 = vrcp.pop %v209
    %v213 = vmul.f32 %v203, %v212
    %v214 = vpack.c.bf16 %v213, %v211
    %v216 = vunpack.c.l.b16 %v214
    %v217 = vunpack.c.h.b16 %v214
    %v218 = vpack.c.b16 %v216, %v216
    %v219 = vpack.c.b16 %v217, %v217
    %vm222 = vcmask 125952
    %223 = vst.msk [vmem:[#allocation7] sm:$0xf] %vm222, %v218
    %224 = vst.msk [vmem:[#allocation7 + $0x4] sm:$0xf] %vm222, %v219
    %v225 = vlaneseq
    %v226 = vshrl.u32 %v225, 7
    %v227 = vadd.s32 %v226, 8
    %v228 = vlaneseq
    %v229 = vand.u32 %v228, 127
    %vm230 = vcmp.eq.s32.totalorder %v226, %v229
    %vm231 = vcmp.eq.s32.totalorder %v227, %v229
    %v233 = vsel %vm191, %v211, 0
    %v236 = vsel %vm191, %v213, 0
    %238 = vmatprep.subr.mxu0 0.0
    %239 = vmatpush1.msra.mxu0 0.0
    %240 = vmatprep.subr.mxu0 0.0
    %241 = vmatpush1.msra.mxu0 0.0
    %242 = vmatprep.subr.mxu0 0.0
    %243 = vmatpush1.msra.mxu0 0.0
    %244 = vmatprep.subr.mxu0 0.0
    %245 = vmatpush1.msra.mxu0 0.0
    %246 = vmatprep.subr.mxu0 0.0
    %247 = vmatpush1.msra.mxu0 0.0
    %248 = vmatprep.subr.mxu0 0.0
    %249 = vmatpush1.msra.mxu0 0.0
    %250 = vmatprep.subr.mxu0 0.0
    %251 = vmatpush1.msra.mxu0 0.0
    %252 = vmatprep.subr.mxu0 0.0
    %253 = vmatpush1.msra.mxu0 0.0
    %254 = vmatprep.subr.mxu0 0.0
    %255 = vmatpush1.msra.mxu0 0.0
    %256 = vmatprep.subr.mxu0 0.0
    %257 = vmatpush1.msra.mxu0 0.0
    %258 = vmatprep.subr.mxu0 0.0
    %259 = vmatpush1.msra.mxu0 0.0
    %260 = vmatprep.subr.mxu0 0.0
    %261 = vmatpush1.msra.mxu0 0.0
    %262 = vmatprep.subr.mxu0 0.0
    %263 = vmatpush1.msra.mxu0 0.0
    %264 = vmatprep.subr.mxu0 0.0
    %265 = vmatpush1.msra.mxu0 0.0
    %266 = vmatprep.subr.mxu0 0.0
    %267 = vmatpush1.msra.mxu0 %v213
    %268 = vmatprep.subr.mxu0 0.0
    %269 = vmatpush1.msra.mxu0 %v211
    %270 = vmatprep.subr.mxu0 0.0
    %271 = vmatpush2.msra.mxu0 0.0
    %272 = vmatprep.subr.mxu0 0.0
    %273 = vmatpush2.msra.mxu0 0.0
    %274 = vmatprep.subr.mxu0 0.0
    %275 = vmatpush2.msra.mxu0 0.0
    %276 = vmatprep.subr.mxu0 0.0
    %277 = vmatpush2.msra.mxu0 0.0
    %278 = vmatprep.subr.mxu0 0.0
    %279 = vmatpush2.msra.mxu0 0.0
    %280 = vmatprep.subr.mxu0 0.0
    %281 = vmatpush2.msra.mxu0 0.0
    %282 = vmatprep.subr.mxu0 0.0
    %283 = vmatpush2.msra.mxu0 0.0
    %284 = vmatprep.subr.mxu0 0.0
    %285 = vmatpush2.msra.mxu0 0.0
    %286 = vmatprep.subr.mxu0 0.0
    %287 = vmatpush2.msra.mxu0 0.0
    %288 = vmatprep.subr.mxu0 0.0
    %289 = vmatpush2.msra.mxu0 0.0
    %290 = vmatprep.subr.mxu0 0.0
    %291 = vmatpush2.msra.mxu0 0.0
    %292 = vmatprep.subr.mxu0 0.0
    %293 = vmatpush2.msra.mxu0 0.0
    %294 = vmatprep.subr.mxu0 0.0
    %295 = vmatpush2.msra.mxu0 0.0
    %296 = vmatprep.subr.mxu0 0.0
    %297 = vmatpush2.msra.mxu0 0.0
    %298 = vmatprep.subr.mxu0 0.0
    %299 = vmatpush2.msra.mxu0 0.0
    %300 = vmatprep.subr.mxu0 0.0
    %301 = vmatpush2.msra.mxu0 0.0
    %302 = vmatprep.mubr.f32.mxu0 0.0
    %303 = vmatmul.mubr.f32.gmra.mxu0 %v233
    %v304 = vpop.f32.mrf.mxu0
    %v305 = vadd.f32 0.0, %v304
    %v306 = vpop.f32.mrf.mxu0
    %307 = vmatprep.mubr.f32.mxu0 0.0
    %308 = vmatmul.mubr.f32.gmra.mxu0 %v236
    %v309 = vpop.f32.mrf.mxu0
    %v310 = vadd.f32 0.0, %v309
    %v311 = vpop.f32.mrf.mxu0
    %312 = vdwg.mxu0
    %v313 = vmul.f32 %v305, 2.0
    %v314 = vmul.f32 %v310, 2.0
    %v315 = vsub.f32 %v313, 1.0
    %v316 = vsub.f32 %v314, 1.0
    %v317 = vsel %vm230, %v315, %v313
    %v318 = vsel %vm231, %v316, %v314
    %v319 = vpack.c.bf16 %v318, %v317
    %v321 = vunpack.c.l.b16 %v319
    %v322 = vunpack.c.h.b16 %v319
    %v323 = vpack.c.b16 %v321, %v321
    %v324 = vpack.c.b16 %v322, %v322
    %s327 = scalar_lea.vmem [#allocation7], 8
    %328 = vst.msk [vmem:[%s327] sm:$0xf] %vm222, %v323
    %329 = vst.msk [vmem:[%s327 + $0x4] sm:$0xf] %vm222, %v324
    %v330 = vpack.c.bf16 %v97, %v96
    %v331 = vld [vmem:[#allocation5] sm:$0xf]
    %v332 = vld [vmem:[#allocation5 + $0x4] sm:$0xf]
    %v333 = vld [vmem:[#allocation5 + $0x8] sm:$0xf]
    %v334 = vld [vmem:[#allocation5 + $0xc] sm:$0xf]
    %v339 = vunpack.c.l.b16 %v331
    %v340 = vunpack.c.l.b16 %v332
    %v341 = vunpack.c.l.b16 %v333
    %v342 = vunpack.c.l.b16 %v334
    %v343 = vpack.c.b16 %v340, %v339
    %v344 = vpack.c.b16 %v342, %v341
    %v348 = vsel %vm52, %v330, 0
    %350 = vmatprep.subr.bf16.mxu0 0
    %351 = vmatpush1.bf16.msra.mxu0 0
    %352 = vmatprep.subr.bf16.mxu0 0
    %353 = vmatpush1.bf16.msra.mxu0 0
    %354 = vmatprep.subr.bf16.mxu0 0
    %355 = vmatpush1.bf16.msra.mxu0 0
    %356 = vmatprep.subr.bf16.mxu0 0
    %357 = vmatpush1.bf16.msra.mxu0 0
    %358 = vmatprep.subr.bf16.mxu0 0
    %359 = vmatpush1.bf16.msra.mxu0 0
    %360 = vmatprep.subr.bf16.mxu0 0
    %361 = vmatpush1.bf16.msra.mxu0 0
    %362 = vmatprep.subr.bf16.mxu0 0
    %363 = vmatpush1.bf16.msra.mxu0 %v344
    %364 = vmatprep.subr.bf16.mxu0 0
    %365 = vmatpush1.bf16.msra.mxu0 %v343
    %366 = vmatprep.subr.bf16.mxu0 0
    %367 = vmatpush2.bf16.msra.mxu0 0
    %368 = vmatprep.subr.bf16.mxu0 0
    %369 = vmatpush2.bf16.msra.mxu0 0
    %370 = vmatprep.subr.bf16.mxu0 0
    %371 = vmatpush2.bf16.msra.mxu0 0
    %372 = vmatprep.subr.bf16.mxu0 0
    %373 = vmatpush2.bf16.msra.mxu0 0
    %374 = vmatprep.subr.bf16.mxu0 0
    %375 = vmatpush2.bf16.msra.mxu0 0
    %376 = vmatprep.subr.bf16.mxu0 0
    %377 = vmatpush2.bf16.msra.mxu0 0
    %378 = vmatprep.subr.bf16.mxu0 0
    %379 = vmatpush2.bf16.msra.mxu0 0
    %380 = vmatprep.subr.bf16.mxu0 0
    %381 = vmatpush2.bf16.msra.mxu0 0
    %382 = vmatprep.mubr.bf16.mxu0 0
    %383 = vmatmul.mubr.bf16.gmra.mxu0 %v348
    %v384 = vpop.f32.mrf.mxu0
    %v385 = vadd.f32 0.0, %v384
    %v386 = vpop.f32.mrf.mxu0
    %v387 = vpop.f32.mrf.mxu0
    %v388 = vadd.f32 0.0, %v387
    %v389 = vpop.f32.mrf.mxu0
    %390 = vdwg.mxu0
    %vm391 = vcmask 850944
    %392 = vst.msk [vmem:[#allocation8] sm:$0xff] %vm391, %v385
    %393 = vst.msk [vmem:[#allocation8 + $0x8] sm:$0xff] %vm391, %v388
    // Predicated region
    $region26: #{tpu_custom_call.1} parent=1 // pred_check
      _
    $region27: #{tpu_custom_call.1} parent=1 // pred_check_branch
      %395 = sbr.rel (0) target = $region29
    $region28: #{tpu_custom_call.1} parent=1 // pred_region
      %s397 = ssub.s32 256, 256
      %398 = vsyncadd [#allocation4], %s397
      %s399 = sshll.u32 [#allocation7], 4
      %s400 = int_to_ptr.vmem [resolvable:$true] %s399
      %405 = dma.vmem_to_hbm [thread:$0]  %s400, 256, %s4, [#allocation4], 64, 64, 4
    $region29: #{tpu_custom_call.1} parent=1 // pred_fallthru
      _
    // Predicated region
    $region30: #{tpu_custom_call.1} parent=1 // pred_check
      _
    $region31: #{tpu_custom_call.1} parent=1 // pred_check_branch
      %407 = sbr.rel (0) target = $region33
    $region32: #{tpu_custom_call.1} parent=1 // pred_region
      %s409 = ssub.s32 256, 256
      %410 = vsyncadd [#allocation9], %s409
      %s411 = sshll.u32 [#allocation8], 4
      %s412 = int_to_ptr.vmem [resolvable:$true] %s411
      %417 = dma.vmem_to_hbm [thread:$0]  %s412, 256, %s5, [#allocation9], 128, 128, 8
    $region33: #{tpu_custom_call.1} parent=1 // pred_fallthru
      _
    // Predicated region
    $region34: #{tpu_custom_call.1} parent=1 // pred_check
      _
    $region35: #{tpu_custom_call.1} parent=1 // pred_check_branch
      %419 = sbr.rel (0) target = $region37
    $region36: #{tpu_custom_call.1} parent=1 // pred_region
      %420 = dma.done [#allocation4], 256
    $region37: #{tpu_custom_call.1} parent=1 // pred_fallthru
      _
    // Predicated region
    $region38: #{tpu_custom_call.1} parent=1 // pred_check
      _
    $region39: #{tpu_custom_call.1} parent=1 // pred_check_branch
      %422 = sbr.rel (0) target = $region41
    $region40: #{tpu_custom_call.1} parent=1 // pred_region
      %423 = dma.done [#allocation9], 256
    $region41: #{tpu_custom_call.1} parent=1 // pred_fallthru
      _
    %424 = vsyncpa [#allocation3], 1
    %425 = vsyncpa [#allocation6], 1
    %426 = vsyncpa [#allocation4], 1
    %427 = vsyncpa [#allocation9], 1

</llo_original>
